<compile_context>
chip_gen: v5e
topology: v5e:2x2
jax: 0.10.0
libtpu: 0.0.40
codegen_flags: <defaults>
</compile_context>

<pallas_src>
import math

import jax
import jax.numpy as jnp
from jax import lax
from jax.experimental import pallas as pl
from jax.experimental.pallas import tpu as pltpu


def ccdpa_kernel(m1_ref, m2_ref, m3_ref, m4_ref, proj_ref, bkq_ref,
                 wccat_ref, bct_ref, out_ref, x_scr, kq_scr):
    # m*_ref blocks: (Bt, C, DS); out_ref block: (Bt, C, DS)
    Bt, C, DS = m1_ref.shape
    D = proj_ref.shape[1] // 2

    # --- Stack the four modality tiles on the channel axis once per grid step
    # (VMEM-local copies; replaces the old wrapper-side HBM concat pass).
    x_scr[:, 0 * C:1 * C, :] = m1_ref[...]
    x_scr[:, 1 * C:2 * C, :] = m2_ref[...]
    x_scr[:, 2 * C:3 * C, :] = m3_ref[...]
    x_scr[:, 3 * C:4 * C, :] = m4_ref[...]

    proj = proj_ref[...]        # (DS, 2D) pooling folded into [Wk^T | Wq^T/sqrt(D)]
    bkq = bkq_ref[...]          # (1, 2D)  [bk | bq/sqrt(D)]
    wc_cat = wccat_ref[...]     # (C, 4C)  concat of the four 1x1x1 conv weights
    bct = bct_ref[...]          # (C, 4)   conv biases, transposed

    # --- Pool + K/Q projection for ALL Bt batches and ALL 4 modalities in one
    # MXU matmul (hoisted out of the per-batch loop, K = DS).
    x_all = x_scr[...].astype(jnp.float32)                 # (Bt, 4C, DS)
    kq = jnp.dot(x_all.reshape(Bt * 4 * C, DS), proj,
                 preferred_element_type=jnp.float32) + bkq  # (Bt*4C, 2D)
    kq_scr[...] = kq.reshape(Bt, 4 * C, 2 * D)

    def body(bi, carry):
        x_b = x_scr[bi]                                     # (4C, DS)
        kq_b = kq_scr[bi]                                   # (4C, 2D)
        k = kq_b[:, :D]                                     # (4C, D)
        q = kq_b[0:C, D:]                                   # (C, D) modality-1 rows

        # logits[c, i] = <q[c], k_i[c]> ; each reduction is over a single vreg
        # (C x D = 8x8), so the XLU cost is negligible and no relayout/transpose
        # of the tiny (4, C) orientation is needed.
        logits = jnp.concatenate(
            [jnp.sum(q * k[i * C:(i + 1) * C, :], axis=-1, keepdims=True)
             for i in range(4)], axis=-1)                   # (C, 4)

        # Exact softmax over the 4 modalities.
        mmax = jnp.max(logits, axis=-1, keepdims=True)
        e = jnp.exp(logits - mmax)
        attn = e / jnp.sum(e, axis=-1, keepdims=True)       # (C, 4)

        # Fold per-(out-channel, modality) attention into the concatenated conv
        # weights and run the four attn-scaled 1x1x1 convs + modality sum as
        # ONE (C,4C)@(4C,DS) matmul.
        w_eff = jnp.concatenate(
            [attn[:, i:i + 1] * wc_cat[:, i * C:(i + 1) * C] for i in range(4)],
            axis=-1)                                        # (C, 4C)
        bias = jnp.sum(attn * bct, axis=-1, keepdims=True)  # (C, 1)

        y = jnp.dot(w_eff, x_b.astype(jnp.float32),
                    preferred_element_type=jnp.float32) + bias   # (C, DS)
        out_ref[bi] = y.astype(out_ref.dtype)
        return carry

    # Fully unroll only small batch tiles; larger tiles keep a rolled loop so
    # the live (4C, DS)/(C, DS) tiles don't overflow the 64-entry vreg file.
    lax.fori_loop(0, Bt, body, 0, unroll=(True if Bt <= 2 else 2))


def _tensorcores_per_chip():
    """Heuristic: v5e / v6e ("lite") chips expose 1 TensorCore; default to 2."""
    try:
        kind = jax.devices()[0].device_kind.lower()
    except Exception:
        return 2
    if "lite" in kind or "v5e" in kind or "v6e" in kind:
        return 1
    return 2  # v7x / v5p / v4 etc.: keep >= 2 parallel grid steps.


def _pick_batch_block(B, C, DS, itemsize, tc_per_chip, vmem_budget=24 << 20):
    """Largest batch tile that fits a conservative VMEM budget.

    Single-TC chips: prefer one fat grid step (bt = B) to amortize the ~0.35us
    per-step overhead.  Dual-TC chips: keep >= 2 grid steps so
    dimension_semantics=('parallel',) can shard across TensorCores.
    The budget (24 MiB) stays under the default scoped VMEM limit on every
    generation, including v7x's 64 MiB physical / 32 MiB scoped.
    """
    def fits(bt):
        io_tile = bt * C * DS * itemsize
        # 4 inputs + 1 output, double-buffered, plus the stacked f32 scratch.
        return 2 * 5 * io_tile + bt * 4 * C * DS * 4 <= vmem_budget

    min_steps = 2 if (tc_per_chip >= 2 and B >= 2) else 1
    best = 1
    for bt in range(1, B + 1):
        if B % bt == 0 and B // bt >= min_steps and fits(bt):
            best = bt
    return best


def ccdpa_forward(m1, m2, m3, m4, params, *, batch_block=None):
    B, C, D, W, H = m1.shape
    S = W * H
    DS = D * S
    x_dtype = m1.dtype

    inv_sqrt_d = 1.0 / math.sqrt(D)
    # Constant block-averaging matrix pool[d*S + s, d] = 1/S, folded straight
    # into the K/Q projection weights (the pool matrix never enters the kernel).
    pool = (jnp.repeat(jnp.eye(D, dtype=jnp.float32), S, axis=0)
            * jnp.float32(1.0 / S))                                   # (DS, D)
    wkt = params["wk"].T.astype(jnp.float32)
    wqt = params["wq"].T.astype(jnp.float32) * inv_sqrt_d
    proj = jnp.concatenate([pool @ wkt, pool @ wqt], axis=1)          # (DS, 2D)
    bkq = jnp.concatenate(
        [params["bk"].astype(jnp.float32),
         params["bq"].astype(jnp.float32) * inv_sqrt_d]).reshape(1, 2 * D)
    wc_cat = jnp.concatenate(
        [params["wc"][i] for i in range(4)], axis=1).astype(jnp.float32)  # (C, 4C)
    bct = params["bc"].T.astype(jnp.float32)                          # (C, 4)

    itemsize = jnp.dtype(x_dtype).itemsize
    if batch_block is None:
        bt = _pick_batch_block(B, C, DS, itemsize, _tensorcores_per_chip())
    else:
        bt = batch_block
    assert B % bt == 0
    grid = (B // bt,)

    # Row-major flatten of (D, W, H) -> DS is layout-free (no HBM pass).
    m1f = m1.reshape(B, C, DS)
    m2f = m2.reshape(B, C, DS)
    m3f = m3.reshape(B, C, DS)
    m4f = m4.reshape(B, C, DS)

    def batch_spec():
        return pl.BlockSpec((bt, C, DS), lambda b: (b, 0, 0))

    def full_spec(shape):
        zeros = (0,) * len(shape)
        return pl.BlockSpec(shape, lambda b, _z=zeros: _z)

    out = pl.pallas_call(
        ccdpa_kernel,
        out_shape=jax.ShapeDtypeStruct((B, C, DS), x_dtype),
        grid_spec=pltpu.PrefetchScalarGridSpec(
            num_scalar_prefetch=0,
            grid=grid,
            in_specs=[batch_spec(), batch_spec(), batch_spec(), batch_spec(),
                      full_spec((DS, 2 * D)),     # proj
                      full_spec((1, 2 * D)),      # bkq
                      full_spec((C, 4 * C)),      # wc_cat
                      full_spec((C, 4))],         # bct
            out_specs=pl.BlockSpec((bt, C, DS), lambda b: (b, 0, 0)),
            scratch_shapes=[pltpu.VMEM((bt, 4 * C, DS), x_dtype),
                            pltpu.VMEM((bt, 4 * C, 2 * D), jnp.float32)],
        ),
        compiler_params=pltpu.CompilerParams(
            dimension_semantics=("parallel",)),
    )(m1f, m2f, m3f, m4f, proj, bkq, wc_cat, bct)
    return out.reshape(B, C, D, W, H)


def ccdpa_reference(m1, m2, m3, m4, params):
    """Pure-JAX reference mirroring the PyTorch forward."""
    B, C, D, W, H = m1.shape
    wq, bq = params["wq"], params["bq"]
    wk, bk = params["wk"], params["bk"]
    wc, bc = params["wc"], params["bc"]
    ms = (m1, m2, m3, m4)
    pooled = [m.mean(axis=(3, 4)) for m in ms]                 # each (B, C, D)
    q = pooled[0] @ wq.T + bq                                  # (B, C, D)
    ks = [p @ wk.T + bk for p in pooled]
    logits = jnp.stack([jnp.sum(q * k, axis=-1) for k in ks], axis=-1)  # (B, C, 4)
    attn = jax.nn.softmax(logits / math.sqrt(D), axis=-1)
    out = jnp.zeros_like(m1)
    for i in range(4):
        y = jnp.einsum("oc,bcdwh->bodwh", wc[i], ms[i])
        y = y + bc[i][None, :, None, None, None]
        out = out + attn[:, :, i][:, :, None, None, None] * y
    return out


def init_params(key, C, D):
    k = jax.random.split(key, 6)
    return {
        "wq": jax.random.normal(k[0], (D, D), jnp.float32) / math.sqrt(D),
        "bq": jax.random.normal(k[1], (D,), jnp.float32) * 0.02,
        "wk": jax.random.normal(k[2], (D, D), jnp.float32) / math.sqrt(D),
        "bk": jax.random.normal(k[3], (D,), jnp.float32) * 0.02,
        "wc": jax.random.normal(k[4], (4, C, C), jnp.float32) / math.sqrt(C),
        "bc": jax.random.normal(k[5], (4, C), jnp.float32) * 0.02,
    }


if __name__ == "__main__":
    # config: in_channels = C = 8, img_dim = D = 8, model_num = 4
    B, C, D, W, H = 2, 8, 8, 8, 8
    key = jax.random.PRNGKey(0)
    kx = jax.random.split(key, 5)
    m1 = jax.random.normal(kx[0], (B, C, D, W, H), jnp.float32)
    m2 = jax.random.normal(kx[1], (B, C, D, W, H), jnp.float32)
    m3 = jax.random.normal(kx[2], (B, C, D, W, H), jnp.float32)
    m4 = jax.random.normal(kx[3], (B, C, D, W, H), jnp.float32)
    params = init_params(kx[4], C, D)

    out = ccdpa_forward(m1, m2, m3, m4, params)
    out = jax.block_until_ready(out)

    ref = jax.block_until_ready(ccdpa_reference(m1, m2, m3, m4, params))
    assert out.shape == (B, C, D, W, H)
    # Softmax normalization is now exact; remaining tolerance covers MXU f32
    # (multi-pass) matmul rounding for the K=DS folded pooling projection.
    assert jnp.allclose(out, ref, atol=2e-3, rtol=2e-3), "mismatch vs reference"

    print("KERNEL_OK")
</pallas_src>

<mosaic_0001>
module attributes {stable_mosaic.version = 11 : i64} {
  func.func @ccdpa_kernel(%arg0: i32, %arg1: memref<1x8x512xf32, #tpu.memory_space<vmem>>, %arg2: memref<1x8x512xf32, #tpu.memory_space<vmem>>, %arg3: memref<1x8x512xf32, #tpu.memory_space<vmem>>, %arg4: memref<1x8x512xf32, #tpu.memory_space<vmem>>, %arg5: memref<512x16xf32, #tpu.memory_space<vmem>>, %arg6: memref<1x16xf32, #tpu.memory_space<vmem>>, %arg7: memref<8x32xf32, #tpu.memory_space<vmem>>, %arg8: memref<8x4xf32, #tpu.memory_space<vmem>>, %arg9: memref<1x8x512xf32, #tpu.memory_space<vmem>>, %arg10: memref<1x32x512xf32, #tpu.memory_space<vmem>>, %arg11: memref<1x32x16xf32, #tpu.memory_space<vmem>>) attributes {dimension_semantics = [#tpu.dimension_semantics<parallel>], iteration_bounds = array<i64: 2>, scalar_prefetch = 0 : i64, scratch_operands = 2 : i64, tpu.core_type = #tpu.core_type<tc>, window_params = [{transform_indices = @transform_0, window_bounds = array<i64: 1, 8, 512>}, {transform_indices = @transform_1, window_bounds = array<i64: 1, 8, 512>}, {transform_indices = @transform_2, window_bounds = array<i64: 1, 8, 512>}, {transform_indices = @transform_3, window_bounds = array<i64: 1, 8, 512>}, {pipeline_mode = #tpu.pipeline_mode<synchronous>, transform_indices = @transform_4, window_bounds = array<i64: 512, 16>}, {pipeline_mode = #tpu.pipeline_mode<synchronous>, transform_indices = @transform_5, window_bounds = array<i64: 1, 16>}, {pipeline_mode = #tpu.pipeline_mode<synchronous>, transform_indices = @transform_6, window_bounds = array<i64: 8, 32>}, {pipeline_mode = #tpu.pipeline_mode<synchronous>, transform_indices = @transform_7, window_bounds = array<i64: 8, 4>}, {transform_indices = @transform_8, window_bounds = array<i64: 1, 8, 512>}]} {
    %c0 = arith.constant 0 : index
    %c0_0 = arith.constant 0 : index
    %c0_1 = arith.constant 0 : index
    %0 = vector.load %arg1[%c0, %c0_0, %c0_1] : memref<1x8x512xf32, #tpu.memory_space<vmem>>, vector<1x8x512xf32>
    %c0_2 = arith.constant 0 : index
    %c0_3 = arith.constant 0 : index
    %c0_4 = arith.constant 0 : index
    %1 = vector.load %arg10[%c0_2, %c0_3, %c0_4] : memref<1x32x512xf32, #tpu.memory_space<vmem>>, vector<1x8x512xf32>
    tpu.vector_store %arg10[%c0_2, %c0_3, %c0_4], %0 {strides = array<i32>} : memref<1x32x512xf32, #tpu.memory_space<vmem>>, vector<1x8x512xf32>,
    %c0_5 = arith.constant 0 : index
    %c0_6 = arith.constant 0 : index
    %c0_7 = arith.constant 0 : index
    %2 = vector.load %arg2[%c0_5, %c0_6, %c0_7] : memref<1x8x512xf32, #tpu.memory_space<vmem>>, vector<1x8x512xf32>
    %c0_8 = arith.constant 0 : index
    %c8 = arith.constant 8 : index
    %c0_9 = arith.constant 0 : index
    %3 = vector.load %arg10[%c0_8, %c8, %c0_9] : memref<1x32x512xf32, #tpu.memory_space<vmem>>, vector<1x8x512xf32>
    tpu.vector_store %arg10[%c0_8, %c8, %c0_9], %2 {strides = array<i32>} : memref<1x32x512xf32, #tpu.memory_space<vmem>>, vector<1x8x512xf32>,
    %c0_10 = arith.constant 0 : index
    %c0_11 = arith.constant 0 : index
    %c0_12 = arith.constant 0 : index
    %4 = vector.load %arg3[%c0_10, %c0_11, %c0_12] : memref<1x8x512xf32, #tpu.memory_space<vmem>>, vector<1x8x512xf32>
    %c0_13 = arith.constant 0 : index
    %c16 = arith.constant 16 : index
    %c0_14 = arith.constant 0 : index
    %5 = vector.load %arg10[%c0_13, %c16, %c0_14] : memref<1x32x512xf32, #tpu.memory_space<vmem>>, vector<1x8x512xf32>
    tpu.vector_store %arg10[%c0_13, %c16, %c0_14], %4 {strides = array<i32>} : memref<1x32x512xf32, #tpu.memory_space<vmem>>, vector<1x8x512xf32>,
    %c0_15 = arith.constant 0 : index
    %c0_16 = arith.constant 0 : index
    %c0_17 = arith.constant 0 : index
    %6 = vector.load %arg4[%c0_15, %c0_16, %c0_17] : memref<1x8x512xf32, #tpu.memory_space<vmem>>, vector<1x8x512xf32>
    %c0_18 = arith.constant 0 : index
    %c24 = arith.constant 24 : index
    %c0_19 = arith.constant 0 : index
    %7 = vector.load %arg10[%c0_18, %c24, %c0_19] : memref<1x32x512xf32, #tpu.memory_space<vmem>>, vector<1x8x512xf32>
    tpu.vector_store %arg10[%c0_18, %c24, %c0_19], %6 {strides = array<i32>} : memref<1x32x512xf32, #tpu.memory_space<vmem>>, vector<1x8x512xf32>,
    %c0_20 = arith.constant 0 : index
    %c0_21 = arith.constant 0 : index
    %8 = vector.load %arg5[%c0_20, %c0_21] : memref<512x16xf32, #tpu.memory_space<vmem>>, vector<512x16xf32>
    %c0_22 = arith.constant 0 : index
    %c0_23 = arith.constant 0 : index
    %9 = vector.load %arg6[%c0_22, %c0_23] : memref<1x16xf32, #tpu.memory_space<vmem>>, vector<1x16xf32>
    %c0_24 = arith.constant 0 : index
    %c0_25 = arith.constant 0 : index
    %10 = vector.load %arg7[%c0_24, %c0_25] : memref<8x32xf32, #tpu.memory_space<vmem>>, vector<8x32xf32>
    %c0_26 = arith.constant 0 : index
    %c0_27 = arith.constant 0 : index
    %11 = vector.load %arg8[%c0_26, %c0_27] : memref<8x4xf32, #tpu.memory_space<vmem>>, vector<8x4xf32>
    %c0_28 = arith.constant 0 : index
    %c0_29 = arith.constant 0 : index
    %c0_30 = arith.constant 0 : index
    %12 = vector.load %arg10[%c0_28, %c0_29, %c0_30] : memref<1x32x512xf32, #tpu.memory_space<vmem>>, vector<1x32x512xf32>
    %13 = vector.shape_cast %12 : vector<1x32x512xf32> to vector<32x512xf32>
    %cst = arith.constant dense<0.000000e+00> : vector<32x16xf32>
    %14 = tpu.matmul %13, %8, %cst {dimension_numbers = #tpu.dot_dimension_numbers<[1], [0], [0], [1], [0, 0, 1, 1], [], []>} : vector<32x512xf32>, vector<512x16xf32>, vector<32x16xf32> -> vector<32x16xf32>
    %15 = vector.broadcast %9 : vector<1x16xf32> to vector<32x16xf32>
    %16 = arith.addf %14, %15 : vector<32x16xf32>
    %17 = vector.shape_cast %16 : vector<32x16xf32> to vector<1x32x16xf32>
    %c0_31 = arith.constant 0 : index
    %c0_32 = arith.constant 0 : index
    %c0_33 = arith.constant 0 : index
    %18 = vector.load %arg11[%c0_31, %c0_32, %c0_33] : memref<1x32x16xf32, #tpu.memory_space<vmem>>, vector<1x32x16xf32>
    tpu.vector_store %arg11[%c0_31, %c0_32, %c0_33], %17 {strides = array<i32>} : memref<1x32x16xf32, #tpu.memory_space<vmem>>, vector<1x32x16xf32>,
    %c0_i32 = arith.constant 0 : i32
    %19 = arith.index_cast %c0_i32 : i32 to index
    %c0_34 = arith.constant 0 : index
    %c0_35 = arith.constant 0 : index
    %20 = vector.load %arg10[%19, %c0_34, %c0_35] : memref<1x32x512xf32, #tpu.memory_space<vmem>>, vector<1x32x512xf32>
    %21 = vector.shape_cast %20 : vector<1x32x512xf32> to vector<32x512xf32>
    %22 = arith.index_cast %c0_i32 : i32 to index
    %c0_36 = arith.constant 0 : index
    %c0_37 = arith.constant 0 : index
    %23 = vector.load %arg11[%22, %c0_36, %c0_37] : memref<1x32x16xf32, #tpu.memory_space<vmem>>, vector<1x32x16xf32>
    %24 = vector.shape_cast %23 : vector<1x32x16xf32> to vector<32x16xf32>
    %25 = vector.extract_strided_slice %24 {offsets = [0, 0], sizes = [32, 8], strides = [1, 1]} : vector<32x16xf32> to vector<32x8xf32>
    %26 = vector.extract_strided_slice %24 {offsets = [0, 8], sizes = [8, 8], strides = [1, 1]} : vector<32x16xf32> to vector<8x8xf32>
    %27 = vector.extract_strided_slice %25 {offsets = [0, 0], sizes = [8, 8], strides = [1, 1]} : vector<32x8xf32> to vector<8x8xf32>
    %28 = arith.mulf %26, %27 : vector<8x8xf32>
    %cst_38 = arith.constant dense<0.000000e+00> : vector<8xf32>
    %29 = vector.multi_reduction <add>, %28, %cst_38 [1] : vector<8x8xf32> to vector<8xf32>
    %30 = vector.shape_cast %29 : vector<8xf32> to vector<8x1xf32>
    %31 = vector.extract_strided_slice %25 {offsets = [8, 0], sizes = [8, 8], strides = [1, 1]} : vector<32x8xf32> to vector<8x8xf32>
    %32 = arith.mulf %26, %31 : vector<8x8xf32>
    %cst_39 = arith.constant dense<0.000000e+00> : vector<8xf32>
    %33 = vector.multi_reduction <add>, %32, %cst_39 [1] : vector<8x8xf32> to vector<8xf32>
    %34 = vector.shape_cast %33 : vector<8xf32> to vector<8x1xf32>
    %35 = vector.extract_strided_slice %25 {offsets = [16, 0], sizes = [8, 8], strides = [1, 1]} : vector<32x8xf32> to vector<8x8xf32>
    %36 = arith.mulf %26, %35 : vector<8x8xf32>
    %cst_40 = arith.constant dense<0.000000e+00> : vector<8xf32>
    %37 = vector.multi_reduction <add>, %36, %cst_40 [1] : vector<8x8xf32> to vector<8xf32>
    %38 = vector.shape_cast %37 : vector<8xf32> to vector<8x1xf32>
    %39 = vector.extract_strided_slice %25 {offsets = [24, 0], sizes = [8, 8], strides = [1, 1]} : vector<32x8xf32> to vector<8x8xf32>
    %40 = arith.mulf %26, %39 : vector<8x8xf32>
    %cst_41 = arith.constant dense<0.000000e+00> : vector<8xf32>
    %41 = vector.multi_reduction <add>, %40, %cst_41 [1] : vector<8x8xf32> to vector<8xf32>
    %42 = vector.shape_cast %41 : vector<8xf32> to vector<8x1xf32>
    %43 = tpu.concatenate %30, %34, %38, %42 in 1 : vector<8x1xf32>, vector<8x1xf32>, vector<8x1xf32>, vector<8x1xf32> -> vector<8x4xf32>
    %cst_42 = arith.constant dense<0xFF800000> : vector<8xf32>
    %44 = vector.multi_reduction <maximumf>, %43, %cst_42 [1] : vector<8x4xf32> to vector<8xf32>
    %45 = vector.shape_cast %44 : vector<8xf32> to vector<8x1xf32>
    %46 = vector.broadcast %45 : vector<8x1xf32> to vector<8x4xf32>
    %47 = arith.subf %43, %46 : vector<8x4xf32>
    %48 = math.exp %47 : vector<8x4xf32>
    %cst_43 = arith.constant dense<0.000000e+00> : vector<8xf32>
    %49 = vector.multi_reduction <add>, %48, %cst_43 [1] : vector<8x4xf32> to vector<8xf32>
    %50 = vector.shape_cast %49 : vector<8xf32> to vector<8x1xf32>
    %51 = vector.broadcast %50 : vector<8x1xf32> to vector<8x4xf32>
    %52 = arith.divf %48, %51 : vector<8x4xf32>
    %53 = vector.extract_strided_slice %52 {offsets = [0, 0], sizes = [8, 1], strides = [1, 1]} : vector<8x4xf32> to vector<8x1xf32>
    %54 = vector.extract_strided_slice %10 {offsets = [0, 0], sizes = [8, 8], strides = [1, 1]} : vector<8x32xf32> to vector<8x8xf32>
    %55 = vector.broadcast %53 : vector<8x1xf32> to vector<8x8xf32>
    %56 = arith.mulf %55, %54 : vector<8x8xf32>
    %57 = vector.extract_strided_slice %52 {offsets = [0, 1], sizes = [8, 1], strides = [1, 1]} : vector<8x4xf32> to vector<8x1xf32>
    %58 = vector.extract_strided_slice %10 {offsets = [0, 8], sizes = [8, 8], strides = [1, 1]} : vector<8x32xf32> to vector<8x8xf32>
    %59 = vector.broadcast %57 : vector<8x1xf32> to vector<8x8xf32>
    %60 = arith.mulf %59, %58 : vector<8x8xf32>
    %61 = vector.extract_strided_slice %52 {offsets = [0, 2], sizes = [8, 1], strides = [1, 1]} : vector<8x4xf32> to vector<8x1xf32>
    %62 = vector.extract_strided_slice %10 {offsets = [0, 16], sizes = [8, 8], strides = [1, 1]} : vector<8x32xf32> to vector<8x8xf32>
    %63 = vector.broadcast %61 : vector<8x1xf32> to vector<8x8xf32>
    %64 = arith.mulf %63, %62 : vector<8x8xf32>
    %65 = vector.extract_strided_slice %52 {offsets = [0, 3], sizes = [8, 1], strides = [1, 1]} : vector<8x4xf32> to vector<8x1xf32>
    %66 = vector.extract_strided_slice %10 {offsets = [0, 24], sizes = [8, 8], strides = [1, 1]} : vector<8x32xf32> to vector<8x8xf32>
    %67 = vector.broadcast %65 : vector<8x1xf32> to vector<8x8xf32>
    %68 = arith.mulf %67, %66 : vector<8x8xf32>
    %69 = tpu.concatenate %56, %60, %64, %68 in 1 : vector<8x8xf32>, vector<8x8xf32>, vector<8x8xf32>, vector<8x8xf32> -> vector<8x32xf32>
    %70 = arith.mulf %52, %11 : vector<8x4xf32>
    %cst_44 = arith.constant dense<0.000000e+00> : vector<8xf32>
    %71 = vector.multi_reduction <add>, %70, %cst_44 [1] : vector<8x4xf32> to vector<8xf32>
    %72 = vector.shape_cast %71 : vector<8xf32> to vector<8x1xf32>
    %cst_45 = arith.constant dense<0.000000e+00> : vector<8x512xf32>
    %73 = tpu.matmul %69, %21, %cst_45 {dimension_numbers = #tpu.dot_dimension_numbers<[1], [0], [0], [1], [0, 0, 1, 1], [], []>} : vector<8x32xf32>, vector<32x512xf32>, vector<8x512xf32> -> vector<8x512xf32>
    %74 = vector.broadcast %72 : vector<8x1xf32> to vector<8x512xf32>
    %75 = arith.addf %73, %74 : vector<8x512xf32>
    %76 = arith.index_cast %c0_i32 : i32 to index
    %c0_46 = arith.constant 0 : index
    %c0_47 = arith.constant 0 : index
    %77 = vector.load %arg9[%76, %c0_46, %c0_47] : memref<1x8x512xf32, #tpu.memory_space<vmem>>, vector<1x8x512xf32>
    %78 = vector.shape_cast %77 : vector<1x8x512xf32> to vector<8x512xf32>
    %79 = vector.shape_cast %75 : vector<8x512xf32> to vector<1x8x512xf32>
    tpu.vector_store %arg9[%76, %c0_46, %c0_47], %79 {strides = array<i32>} : memref<1x8x512xf32, #tpu.memory_space<vmem>>, vector<1x8x512xf32>,
    %c1_i32 = arith.constant 1 : i32
    return
  }
  func.func @transform_0(%arg0: i32) -> (i32, i32, i32) {
    %c0_i32 = arith.constant 0 : i32
    %c0_i32_0 = arith.constant 0 : i32
    %c0_i32_1 = arith.constant 0 : i32
    return %arg0, %c0_i32, %c0_i32_0 : i32, i32, i32
  }
  func.func @transform_1(%arg0: i32) -> (i32, i32, i32) {
    %c0_i32 = arith.constant 0 : i32
    %c0_i32_0 = arith.constant 0 : i32
    %c0_i32_1 = arith.constant 0 : i32
    return %arg0, %c0_i32, %c0_i32_0 : i32, i32, i32
  }
  func.func @transform_2(%arg0: i32) -> (i32, i32, i32) {
    %c0_i32 = arith.constant 0 : i32
    %c0_i32_0 = arith.constant 0 : i32
    %c0_i32_1 = arith.constant 0 : i32
    return %arg0, %c0_i32, %c0_i32_0 : i32, i32, i32
  }
  func.func @transform_3(%arg0: i32) -> (i32, i32, i32) {
    %c0_i32 = arith.constant 0 : i32
    %c0_i32_0 = arith.constant 0 : i32
    %c0_i32_1 = arith.constant 0 : i32
    return %arg0, %c0_i32, %c0_i32_0 : i32, i32, i32
  }
  func.func @transform_4(%arg0: i32) -> (i32, i32) {
    %c0_i32 = arith.constant 0 : i32
    %c0_i32_0 = arith.constant 0 : i32
    %c0_i32_1 = arith.constant 0 : i32
    return %c0_i32, %c0_i32_0 : i32, i32
  }
  func.func @transform_5(%arg0: i32) -> (i32, i32) {
    %c0_i32 = arith.constant 0 : i32
    %c0_i32_0 = arith.constant 0 : i32
    %c0_i32_1 = arith.constant 0 : i32
    return %c0_i32, %c0_i32_0 : i32, i32
  }
  func.func @transform_6(%arg0: i32) -> (i32, i32) {
    %c0_i32 = arith.constant 0 : i32
    %c0_i32_0 = arith.constant 0 : i32
    %c0_i32_1 = arith.constant 0 : i32
    return %c0_i32, %c0_i32_0 : i32, i32
  }
  func.func @transform_7(%arg0: i32) -> (i32, i32) {
    %c0_i32 = arith.constant 0 : i32
    %c0_i32_0 = arith.constant 0 : i32
    %c0_i32_1 = arith.constant 0 : i32
    return %c0_i32, %c0_i32_0 : i32, i32
  }
  func.func @transform_8(%arg0: i32) -> (i32, i32, i32) {
    %c0_i32 = arith.constant 0 : i32
    %c0_i32_0 = arith.constant 0 : i32
    %c0_i32_1 = arith.constant 0 : i32
    return %arg0, %c0_i32, %c0_i32_0 : i32, i32, i32
  }
}

</mosaic_0001>

<llo_original>
// kernel: tpu_custom_call.1
$region0: #{tpu_custom_call.1}
  #allocation0 [shape = 'u32[]', space=smem, size = 0x4, offset = 0x4, fixed_abs, tag = 'smem constant byte address 0x4 - core index']
  #allocation1 [shape = 'u32[72,128]{1,0:T(1,128)}', space=vmem, size = 0x9000, scoped, tag = 'internal scratch']
  #allocation2 [shape = 'f32[1,32,512]{2,1,0:T(8,128)}', space=vmem, size = 0x10000, scoped, tag = 'scratch operand']
  #allocation3 [shape = 'f32[1,32,16]{2,1,0:T(8,128)}', space=vmem, size = 0x4000, scoped, tag = 'scratch operand']
  %s0 = inlined_call_operand.vmem [shape: f32[2,8,512], index: 0, kind: input, shape index: {}]
  %s1 = inlined_call_operand.vmem [shape: f32[2,8,512], index: 1, kind: input, shape index: {}]
  %s2 = inlined_call_operand.vmem [shape: f32[2,8,512], index: 2, kind: input, shape index: {}]
  %s3 = inlined_call_operand.vmem [shape: f32[2,8,512], index: 3, kind: input, shape index: {}]
  %s4 = inlined_call_operand.vmem [shape: f32[512,16], index: 4, kind: input, shape index: {}]
  %s5 = inlined_call_operand.vmem [shape: f32[1,16], index: 5, kind: input, shape index: {}]
  %s6 = inlined_call_operand.vmem [shape: f32[8,32], index: 6, kind: input, shape index: {}]
  %s7 = inlined_call_operand.vmem [shape: f32[8,4], index: 7, kind: input, shape index: {}]
  %s8 = inlined_call_operand.hbm [shape: f32[2,8,512], index: 8, kind: output, shape index: {}]
  %s9 = sld [smem:[#allocation0]]
  $region65: #{tpu_custom_call.1} parent=0
    _
  %s11 = ssub.s32 1, %s9
  %s12 = scalar_select 0, %s11, %s9
  $region1: #{tpu_custom_call.1} parent=0
    #allocation4 [shape = 'u8[32768]{0}', space=vmem, size = 0x8000, scoped, tag = 'output window, operand 0']
    #allocation5 [shape = 's32[2]{0}', space=sflag, size = 0x8, scoped, tag = 'scoped memory for tpu_custom_call.1']
    %13 = vsyncpa [#allocation5], 0
    %s14 = scalar_lea.sflag [#allocation5], 1
    %15 = vsyncpa %s14, 0
    loop: start=0, step=1, limit=4
    $region2: #{tpu_custom_call.1} parent=1 // loop_pre_header
      _
    $region3: #{tpu_custom_call.1} parent=1 // loop_header
      %s17 = sphi 0, %s21
      %p18 = scmp.ge.s32.totalorder %s17, 4
      %s27 = sphi 0, %s29
      %s30 = sphi 0, %s27
      %s31 = sphi 0, %s30
      %s47 = sphi 0, %s31
      %s53 = sphi 0, %s55
      %s56 = sphi 0, %s53
      %s57 = sphi 0, %s56
      %s73 = sphi 0, %s57
      %s79 = sphi 0, %s81
      %s82 = sphi 0, %s79
      %s83 = sphi 0, %s82
      %s99 = sphi 0, %s83
      %s105 = sphi 0, %s107
      %s108 = sphi 0, %s105
      %s109 = sphi 0, %s108
      %s125 = sphi 0, %s109
      %s129 = sphi 0, %s129
      %s131 = sphi 0, %s129
      %s132 = sphi 0, %s131
      %s146 = sphi 0, %s132
      %s150 = sphi 0, %s150
      %s152 = sphi 0, %s150
      %s153 = sphi 0, %s152
      %s167 = sphi 0, %s153
      %s171 = sphi 0, %s171
      %s173 = sphi 0, %s171
      %s174 = sphi 0, %s173
      %s188 = sphi 0, %s174
      %s192 = sphi 0, %s192
      %s194 = sphi 0, %s192
      %s195 = sphi 0, %s194
      %s209 = sphi 0, %s195
      %s215 = sphi 0, %s217
      %s218 = sphi 0, %s215
      %s219 = sphi 0, %s218
      %s235 = sphi 0, %s219
    $region4: #{tpu_custom_call.1} parent=1 // loop_header_branch
      %20 = sbr.rel (%p18) target = $region8
    $region5: #{tpu_custom_call.1} parent=1 // loop_body
      %s22 = ssub.s32 %s17, 1
      %s23 = ssub.s32 %s17, 2
      %s24 = sadd.s32 %s17, 1
      %s25 = ssub.s32 %s17, %s24
      %p26 = scmp.eq.s32.totalorder %s25, 0
      %s28 = sadd.s32 %s27, 1
      %s29 = scalar_select %p26, %s27, %s28
      %p32 = pneg %p26
      %p33 = scmp.eq.s32.totalorder %s17, 1
      %p34 = por %p32, %p33
      %p35 = scmp.ne.s32.totalorder %s27, %s30
      %p36 = scmp.eq.s32.totalorder %s17, 0
      %p37 = por %p35, %p36
      %p38 = scmp.ne.s32.totalorder %s27, %s30
      %p39 = scmp.eq.s32.totalorder %s22, 1
      %p40 = por %p38, %p39
      %p41 = scmp.ne.s32.totalorder %s30, %s31
      %p42 = scmp.eq.s32.totalorder %s22, 0
      %p43 = por %p41, %p42
      %p44 = scmp.ne.s32.totalorder %s30, %s31
      %p45 = scmp.eq.s32.totalorder %s23, 1
      %p46 = por %p44, %p45
      %p48 = scmp.ne.s32.totalorder %s31, %s47
      %p49 = scmp.eq.s32.totalorder %s23, 0
      %p50 = por %p48, %p49
      %s51 = ssub.s32 %s17, %s24
      %p52 = scmp.eq.s32.totalorder %s51, 0
      %s54 = sadd.s32 %s53, 1
      %s55 = scalar_select %p52, %s53, %s54
      %p58 = pneg %p52
      %p59 = scmp.eq.s32.totalorder %s17, 1
      %p60 = por %p58, %p59
      %p61 = scmp.ne.s32.totalorder %s53, %s56
      %p62 = scmp.eq.s32.totalorder %s17, 0
      %p63 = por %p61, %p62
      %p64 = scmp.ne.s32.totalorder %s53, %s56
      %p65 = scmp.eq.s32.totalorder %s22, 1
      %p66 = por %p64, %p65
      %p67 = scmp.ne.s32.totalorder %s56, %s57
      %p68 = scmp.eq.s32.totalorder %s22, 0
      %p69 = por %p67, %p68
      %p70 = scmp.ne.s32.totalorder %s56, %s57
      %p71 = scmp.eq.s32.totalorder %s23, 1
      %p72 = por %p70, %p71
      %p74 = scmp.ne.s32.totalorder %s57, %s73
      %p75 = scmp.eq.s32.totalorder %s23, 0
      %p76 = por %p74, %p75
      %s77 = ssub.s32 %s17, %s24
      %p78 = scmp.eq.s32.totalorder %s77, 0
      %s80 = sadd.s32 %s79, 1
      %s81 = scalar_select %p78, %s79, %s80
      %p84 = pneg %p78
      %p85 = scmp.eq.s32.totalorder %s17, 1
      %p86 = por %p84, %p85
      %p87 = scmp.ne.s32.totalorder %s79, %s82
      %p88 = scmp.eq.s32.totalorder %s17, 0
      %p89 = por %p87, %p88
      %p90 = scmp.ne.s32.totalorder %s79, %s82
      %p91 = scmp.eq.s32.totalorder %s22, 1
      %p92 = por %p90, %p91
      %p93 = scmp.ne.s32.totalorder %s82, %s83
      %p94 = scmp.eq.s32.totalorder %s22, 0
      %p95 = por %p93, %p94
      %p96 = scmp.ne.s32.totalorder %s82, %s83
      %p97 = scmp.eq.s32.totalorder %s23, 1
      %p98 = por %p96, %p97
      %p100 = scmp.ne.s32.totalorder %s83, %s99
      %p101 = scmp.eq.s32.totalorder %s23, 0
      %p102 = por %p100, %p101
      %s103 = ssub.s32 %s17, %s24
      %p104 = scmp.eq.s32.totalorder %s103, 0
      %s106 = sadd.s32 %s105, 1
      %s107 = scalar_select %p104, %s105, %s106
      %p110 = pneg %p104
      %p111 = scmp.eq.s32.totalorder %s17, 1
      %p112 = por %p110, %p111
      %p113 = scmp.ne.s32.totalorder %s105, %s108
      %p114 = scmp.eq.s32.totalorder %s17, 0
      %p115 = por %p113, %p114
      %p116 = scmp.ne.s32.totalorder %s105, %s108
      %p117 = scmp.eq.s32.totalorder %s22, 1
      %p118 = por %p116, %p117
      %p119 = scmp.ne.s32.totalorder %s108, %s109
      %p120 = scmp.eq.s32.totalorder %s22, 0
      %p121 = por %p119, %p120
      %p122 = scmp.ne.s32.totalorder %s108, %s109
      %p123 = scmp.eq.s32.totalorder %s23, 1
      %p124 = por %p122, %p123
      %p126 = scmp.ne.s32.totalorder %s109, %s125
      %p127 = scmp.eq.s32.totalorder %s23, 0
      %p128 = por %p126, %p127
      %s130 = sadd.s32 %s129, 1
      %p133 = scmp.eq.s32.totalorder %s17, 1
      %p134 = scmp.ne.s32.totalorder %s129, %s131
      %p135 = scmp.eq.s32.totalorder %s17, 0
      %p136 = por %p134, %p135
      %p137 = scmp.ne.s32.totalorder %s129, %s131
      %p138 = scmp.eq.s32.totalorder %s22, 1
      %p139 = por %p137, %p138
      %p140 = scmp.ne.s32.totalorder %s131, %s132
      %p141 = scmp.eq.s32.totalorder %s22, 0
      %p142 = por %p140, %p141
      %p143 = scmp.ne.s32.totalorder %s131, %s132
      %p144 = scmp.eq.s32.totalorder %s23, 1
      %p145 = por %p143, %p144
      %p147 = scmp.ne.s32.totalorder %s132, %s146
      %p148 = scmp.eq.s32.totalorder %s23, 0
      %p149 = por %p147, %p148
      %s151 = sadd.s32 %s150, 1
      %p154 = scmp.eq.s32.totalorder %s17, 1
      %p155 = scmp.ne.s32.totalorder %s150, %s152
      %p156 = scmp.eq.s32.totalorder %s17, 0
      %p157 = por %p155, %p156
      %p158 = scmp.ne.s32.totalorder %s150, %s152
      %p159 = scmp.eq.s32.totalorder %s22, 1
      %p160 = por %p158, %p159
      %p161 = scmp.ne.s32.totalorder %s152, %s153
      %p162 = scmp.eq.s32.totalorder %s22, 0
      %p163 = por %p161, %p162
      %p164 = scmp.ne.s32.totalorder %s152, %s153
      %p165 = scmp.eq.s32.totalorder %s23, 1
      %p166 = por %p164, %p165
      %p168 = scmp.ne.s32.totalorder %s153, %s167
      %p169 = scmp.eq.s32.totalorder %s23, 0
      %p170 = por %p168, %p169
      %s172 = sadd.s32 %s171, 1
      %p175 = scmp.eq.s32.totalorder %s17, 1
      %p176 = scmp.ne.s32.totalorder %s171, %s173
      %p177 = scmp.eq.s32.totalorder %s17, 0
      %p178 = por %p176, %p177
      %p179 = scmp.ne.s32.totalorder %s171, %s173
      %p180 = scmp.eq.s32.totalorder %s22, 1
      %p181 = por %p179, %p180
      %p182 = scmp.ne.s32.totalorder %s173, %s174
      %p183 = scmp.eq.s32.totalorder %s22, 0
      %p184 = por %p182, %p183
      %p185 = scmp.ne.s32.totalorder %s173, %s174
      %p186 = scmp.eq.s32.totalorder %s23, 1
      %p187 = por %p185, %p186
      %p189 = scmp.ne.s32.totalorder %s174, %s188
      %p190 = scmp.eq.s32.totalorder %s23, 0
      %p191 = por %p189, %p190
      %s193 = sadd.s32 %s192, 1
      %p196 = scmp.eq.s32.totalorder %s17, 1
      %p197 = scmp.ne.s32.totalorder %s192, %s194
      %p198 = scmp.eq.s32.totalorder %s17, 0
      %p199 = por %p197, %p198
      %p200 = scmp.ne.s32.totalorder %s192, %s194
      %p201 = scmp.eq.s32.totalorder %s22, 1
      %p202 = por %p200, %p201
      %p203 = scmp.ne.s32.totalorder %s194, %s195
      %p204 = scmp.eq.s32.totalorder %s22, 0
      %p205 = por %p203, %p204
      %p206 = scmp.ne.s32.totalorder %s194, %s195
      %p207 = scmp.eq.s32.totalorder %s23, 1
      %p208 = por %p206, %p207
      %p210 = scmp.ne.s32.totalorder %s195, %s209
      %p211 = scmp.eq.s32.totalorder %s23, 0
      %p212 = por %p210, %p211
      %s213 = ssub.s32 %s17, %s24
      %p214 = scmp.eq.s32.totalorder %s213, 0
      %s216 = sadd.s32 %s215, 1
      %s217 = scalar_select %p214, %s215, %s216
      %p220 = pneg %p214
      %p221 = scmp.eq.s32.totalorder %s17, 1
      %p222 = por %p220, %p221
      %p223 = scmp.ne.s32.totalorder %s215, %s218
      %p224 = scmp.eq.s32.totalorder %s17, 0
      %p225 = por %p223, %p224
      %p226 = scmp.ne.s32.totalorder %s215, %s218
      %p227 = scmp.eq.s32.totalorder %s22, 1
      %p228 = por %p226, %p227
      %p229 = scmp.ne.s32.totalorder %s218, %s219
      %p230 = scmp.eq.s32.totalorder %s22, 0
      %p231 = por %p229, %p230
      %p232 = scmp.ne.s32.totalorder %s218, %s219
      %p233 = scmp.eq.s32.totalorder %s23, 1
      %p234 = por %p232, %p233
      %p236 = scmp.ne.s32.totalorder %s219, %s235
      %p237 = scmp.eq.s32.totalorder %s23, 0
      %p238 = por %p236, %p237
      %p239 = scmp.le.s32.totalorder 1, %s17
      %p240 = scmp.lt.s32.totalorder %s17, 3
      %p241 = pnand %p239, %p240
      %p242 = pneg %p241
      // Predicated region
      $region9: #{tpu_custom_call.1} parent=5 // pred_check
        _
      $region10: #{tpu_custom_call.1} parent=5 // pred_check_branch
        %244 = sbr.rel (%p241) target = $region12
      $region11: #{tpu_custom_call.1} parent=5 // pred_region
        %s245 = ssub.s32 %s17, 1
        // Predicated region
        $region13: #{tpu_custom_call.1} parent=11 // pred_check
          %p246 = pneg %p142
        $region14: #{tpu_custom_call.1} parent=11 // pred_check_branch
          %248 = sbr.rel (%p246) target = $region16
        $region15: #{tpu_custom_call.1} parent=11 // pred_region
          _
        $region16: #{tpu_custom_call.1} parent=11 // pred_fallthru
          _
        // Predicated region
        $region17: #{tpu_custom_call.1} parent=11 // pred_check
          %p249 = pneg %p163
        $region18: #{tpu_custom_call.1} parent=11 // pred_check_branch
          %251 = sbr.rel (%p249) target = $region20
        $region19: #{tpu_custom_call.1} parent=11 // pred_region
          _
        $region20: #{tpu_custom_call.1} parent=11 // pred_fallthru
          _
        // Predicated region
        $region21: #{tpu_custom_call.1} parent=11 // pred_check
          %p252 = pneg %p184
        $region22: #{tpu_custom_call.1} parent=11 // pred_check_branch
          %254 = sbr.rel (%p252) target = $region24
        $region23: #{tpu_custom_call.1} parent=11 // pred_region
          _
        $region24: #{tpu_custom_call.1} parent=11 // pred_fallthru
          _
        // Predicated region
        $region25: #{tpu_custom_call.1} parent=11 // pred_check
          %p255 = pneg %p205
        $region26: #{tpu_custom_call.1} parent=11 // pred_check_branch
          %257 = sbr.rel (%p255) target = $region28
        $region27: #{tpu_custom_call.1} parent=11 // pred_region
          _
        $region28: #{tpu_custom_call.1} parent=11 // pred_fallthru
          _
      $region12: #{tpu_custom_call.1} parent=5 // pred_fallthru
        _
      %p258 = scmp.lt.s32.totalorder %s17, 2
      // Predicated region
      $region29: #{tpu_custom_call.1} parent=5 // pred_check
        %p259 = pneg %p258
      $region30: #{tpu_custom_call.1} parent=5 // pred_check_branch
        %261 = sbr.rel (%p259) target = $region32
      $region31: #{tpu_custom_call.1} parent=5 // pred_region
        // Predicated region
        $region33: #{tpu_custom_call.1} parent=31 // pred_check
          %p262 = pneg %p37
        $region34: #{tpu_custom_call.1} parent=31 // pred_check_branch
          %264 = sbr.rel (%p262) target = $region36
        $region35: #{tpu_custom_call.1} parent=31 // pred_region
          %p265 = scmp.lt.s32.totalorder %s17, 1
          %s266 = scalar_select %p265, %s17, 1
          %s267 = smul.addr %s266, 4
          %s268 = smul.addr %s267, 8
          %s269 = scalar_lea.vmem %s0, %s268
        $region36: #{tpu_custom_call.1} parent=31 // pred_fallthru
          _
        // Predicated region
        $region37: #{tpu_custom_call.1} parent=31 // pred_check
          %p270 = pneg %p63
        $region38: #{tpu_custom_call.1} parent=31 // pred_check_branch
          %272 = sbr.rel (%p270) target = $region40
        $region39: #{tpu_custom_call.1} parent=31 // pred_region
          %p273 = scmp.lt.s32.totalorder %s17, 1
          %s274 = scalar_select %p273, %s17, 1
          %s275 = smul.addr %s274, 4
          %s276 = smul.addr %s275, 8
          %s277 = scalar_lea.vmem %s1, %s276
        $region40: #{tpu_custom_call.1} parent=31 // pred_fallthru
          _
        // Predicated region
        $region41: #{tpu_custom_call.1} parent=31 // pred_check
          %p278 = pneg %p89
        $region42: #{tpu_custom_call.1} parent=31 // pred_check_branch
          %280 = sbr.rel (%p278) target = $region44
        $region43: #{tpu_custom_call.1} parent=31 // pred_region
          %p281 = scmp.lt.s32.totalorder %s17, 1
          %s282 = scalar_select %p281, %s17, 1
          %s283 = smul.addr %s282, 4
          %s284 = smul.addr %s283, 8
          %s285 = scalar_lea.vmem %s2, %s284
        $region44: #{tpu_custom_call.1} parent=31 // pred_fallthru
          _
        // Predicated region
        $region45: #{tpu_custom_call.1} parent=31 // pred_check
          %p286 = pneg %p115
        $region46: #{tpu_custom_call.1} parent=31 // pred_check_branch
          %288 = sbr.rel (%p286) target = $region48
        $region47: #{tpu_custom_call.1} parent=31 // pred_region
          %p289 = scmp.lt.s32.totalorder %s17, 1
          %s290 = scalar_select %p289, %s17, 1
          %s291 = smul.addr %s290, 4
          %s292 = smul.addr %s291, 8
          %s293 = scalar_lea.vmem %s3, %s292
        $region48: #{tpu_custom_call.1} parent=31 // pred_fallthru
          _
      $region32: #{tpu_custom_call.1} parent=5 // pred_fallthru
        _
      %p294 = scmp.le.s32.totalorder 1, %s17
      %p295 = scmp.lt.s32.totalorder %s17, 3
      %p296 = pnand %p294, %p295
      %p297 = pneg %p296
      // Predicated region
      $region49: #{tpu_custom_call.1} parent=5 // pred_check
        _
      $region50: #{tpu_custom_call.1} parent=5 // pred_check_branch
        %299 = sbr.rel (%p296) target = $region52
      $region51: #{tpu_custom_call.1} parent=5 // pred_region
        %s300 = ssub.s32 %s17, 1
        %p301 = scmp.lt.s32.totalorder %s22, 1
        %s302 = scalar_select %p301, %s22, 1
        %s303 = smul.addr %s302, 4
        %s304 = smul.addr %s303, 8
        %s305 = scalar_lea.vmem %s0, %s304
        %p306 = pneg %p43
        %p307 = pneg %p40
        %p308 = scmp.lt.s32.totalorder %s22, 1
        %s309 = scalar_select %p308, %s22, 1
        %s310 = smul.addr %s309, 4
        %s311 = smul.addr %s310, 8
        %s312 = scalar_lea.vmem %s1, %s311
        %p313 = pneg %p69
        %p314 = pneg %p66
        %p315 = scmp.lt.s32.totalorder %s22, 1
        %s316 = scalar_select %p315, %s22, 1
        %s317 = smul.addr %s316, 4
        %s318 = smul.addr %s317, 8
        %s319 = scalar_lea.vmem %s2, %s318
        %p320 = pneg %p95
        %p321 = pneg %p92
        %p322 = scmp.lt.s32.totalorder %s22, 1
        %s323 = scalar_select %p322, %s22, 1
        %s324 = smul.addr %s323, 4
        %s325 = smul.addr %s324, 8
        %s326 = scalar_lea.vmem %s3, %s325
        %p327 = pneg %p121
        %p328 = pneg %p118
        %p329 = pneg %p142
        %p330 = pneg %p139
        %p331 = pneg %p163
        %p332 = pneg %p160
        %p333 = pneg %p184
        %p334 = pneg %p181
        %p335 = pneg %p205
        %p336 = pneg %p202
        %p337 = pneg %p231
        %p338 = pneg %p228
        %s339 = sand.u32 %s218, 1
        %s340 = scalar_lea.sflag [#allocation5], %s339
        %s341 = sand.u32 %s218, 1
        %s342 = smul.addr %s341, 32
        %s343 = scalar_lea.vmem [#allocation4], %s342
        %p344 = scmp.lt.s32.totalorder %s22, 1
        %s345 = scalar_select %p344, %s22, 1
        %s346 = smul.addr %s345, 4
        %s347 = smul.addr %s346, 8
        %s348 = scalar_lea.vmem %s0, %s347
        %p349 = scmp.lt.s32.totalorder %s22, 1
        %s350 = scalar_select %p349, %s22, 1
        %s351 = smul.addr %s350, 4
        %s352 = smul.addr %s351, 8
        %s353 = scalar_lea.vmem %s1, %s352
        %p354 = scmp.lt.s32.totalorder %s22, 1
        %s355 = scalar_select %p354, %s22, 1
        %s356 = smul.addr %s355, 4
        %s357 = smul.addr %s356, 8
        %s358 = scalar_lea.vmem %s2, %s357
        %p359 = scmp.lt.s32.totalorder %s22, 1
        %s360 = scalar_select %p359, %s22, 1
        %s361 = smul.addr %s360, 4
        %s362 = smul.addr %s361, 8
        %s363 = scalar_lea.vmem %s3, %s362
        %v364 = vld [vmem:[%s348] sm:$0xff]
        %v365 = vld [vmem:[%s348 + $0x8] sm:$0xff]
        %v366 = vld [vmem:[%s348 + $0x10] sm:$0xff]
        %v367 = vld [vmem:[%s348 + $0x18] sm:$0xff]
        %368 = vst [vmem:[#allocation2] sm:$0xff] %v364
        %369 = vst [vmem:[#allocation2 + $0x8] sm:$0xff] %v365
        %370 = vst [vmem:[#allocation2 + $0x10] sm:$0xff] %v366
        %371 = vst [vmem:[#allocation2 + $0x18] sm:$0xff] %v367
        %v372 = vld [vmem:[%s353] sm:$0xff]
        %v373 = vld [vmem:[%s353 + $0x8] sm:$0xff]
        %v374 = vld [vmem:[%s353 + $0x10] sm:$0xff]
        %v375 = vld [vmem:[%s353 + $0x18] sm:$0xff]
        %376 = vst [vmem:[#allocation2 + $0x20] sm:$0xff] %v372
        %377 = vst [vmem:[#allocation2 + $0x28] sm:$0xff] %v373
        %378 = vst [vmem:[#allocation2 + $0x30] sm:$0xff] %v374
        %379 = vst [vmem:[#allocation2 + $0x38] sm:$0xff] %v375
        %v380 = vld [vmem:[%s358] sm:$0xff]
        %v381 = vld [vmem:[%s358 + $0x8] sm:$0xff]
        %v382 = vld [vmem:[%s358 + $0x10] sm:$0xff]
        %v383 = vld [vmem:[%s358 + $0x18] sm:$0xff]
        %384 = vst [vmem:[#allocation2 + $0x40] sm:$0xff] %v380
        %385 = vst [vmem:[#allocation2 + $0x48] sm:$0xff] %v381
        %386 = vst [vmem:[#allocation2 + $0x50] sm:$0xff] %v382
        %387 = vst [vmem:[#allocation2 + $0x58] sm:$0xff] %v383
        %v388 = vld [vmem:[%s363] sm:$0xff]
        %v389 = vld [vmem:[%s363 + $0x8] sm:$0xff]
        %v390 = vld [vmem:[%s363 + $0x10] sm:$0xff]
        %v391 = vld [vmem:[%s363 + $0x18] sm:$0xff]
        %392 = vst [vmem:[#allocation2 + $0x60] sm:$0xff] %v388
        %393 = vst [vmem:[#allocation2 + $0x68] sm:$0xff] %v389
        %394 = vst [vmem:[#allocation2 + $0x70] sm:$0xff] %v390
        %395 = vst [vmem:[#allocation2 + $0x78] sm:$0xff] %v391
        %v396 = vld [vmem:[%s4] sm:$0xff]
        %v397 = vld [vmem:[%s4 + $0x8] sm:$0xff]
        %v398 = vld [vmem:[%s4 + $0x10] sm:$0xff]
        %v399 = vld [vmem:[%s4 + $0x18] sm:$0xff]
        %v400 = vld [vmem:[%s4 + $0x20] sm:$0xff]
        %v401 = vld [vmem:[%s4 + $0x28] sm:$0xff]
        %v402 = vld [vmem:[%s4 + $0x30] sm:$0xff]
        %v403 = vld [vmem:[%s4 + $0x38] sm:$0xff]
        %v404 = vld [vmem:[%s4 + $0x40] sm:$0xff]
        %v405 = vld [vmem:[%s4 + $0x48] sm:$0xff]
        %v406 = vld [vmem:[%s4 + $0x50] sm:$0xff]
        %v407 = vld [vmem:[%s4 + $0x58] sm:$0xff]
        %v408 = vld [vmem:[%s4 + $0x60] sm:$0xff]
        %v409 = vld [vmem:[%s4 + $0x68] sm:$0xff]
        %v410 = vld [vmem:[%s4 + $0x70] sm:$0xff]
        %v411 = vld [vmem:[%s4 + $0x78] sm:$0xff]
        %v412 = vld [vmem:[%s4 + $0x80] sm:$0xff]
        %v413 = vld [vmem:[%s4 + $0x88] sm:$0xff]
        %v414 = vld [vmem:[%s4 + $0x90] sm:$0xff]
        %v415 = vld [vmem:[%s4 + $0x98] sm:$0xff]
        %v416 = vld [vmem:[%s4 + $0xa0] sm:$0xff]
        %v417 = vld [vmem:[%s4 + $0xa8] sm:$0xff]
        %v418 = vld [vmem:[%s4 + $0xb0] sm:$0xff]
        %v419 = vld [vmem:[%s4 + $0xb8] sm:$0xff]
        %v420 = vld [vmem:[%s4 + $0xc0] sm:$0xff]
        %v421 = vld [vmem:[%s4 + $0xc8] sm:$0xff]
        %v422 = vld [vmem:[%s4 + $0xd0] sm:$0xff]
        %v423 = vld [vmem:[%s4 + $0xd8] sm:$0xff]
        %v424 = vld [vmem:[%s4 + $0xe0] sm:$0xff]
        %v425 = vld [vmem:[%s4 + $0xe8] sm:$0xff]
        %v426 = vld [vmem:[%s4 + $0xf0] sm:$0xff]
        %v427 = vld [vmem:[%s4 + $0xf8] sm:$0xff]
        %v428 = vld [vmem:[%s4 + $0x100] sm:$0xff]
        %v429 = vld [vmem:[%s4 + $0x108] sm:$0xff]
        %v430 = vld [vmem:[%s4 + $0x110] sm:$0xff]
        %v431 = vld [vmem:[%s4 + $0x118] sm:$0xff]
        %v432 = vld [vmem:[%s4 + $0x120] sm:$0xff]
        %v433 = vld [vmem:[%s4 + $0x128] sm:$0xff]
        %v434 = vld [vmem:[%s4 + $0x130] sm:$0xff]
        %v435 = vld [vmem:[%s4 + $0x138] sm:$0xff]
        %v436 = vld [vmem:[%s4 + $0x140] sm:$0xff]
        %v437 = vld [vmem:[%s4 + $0x148] sm:$0xff]
        %v438 = vld [vmem:[%s4 + $0x150] sm:$0xff]
        %v439 = vld [vmem:[%s4 + $0x158] sm:$0xff]
        %v440 = vld [vmem:[%s4 + $0x160] sm:$0xff]
        %v441 = vld [vmem:[%s4 + $0x168] sm:$0xff]
        %v442 = vld [vmem:[%s4 + $0x170] sm:$0xff]
        %v443 = vld [vmem:[%s4 + $0x178] sm:$0xff]
        %v444 = vld [vmem:[%s4 + $0x180] sm:$0xff]
        %v445 = vld [vmem:[%s4 + $0x188] sm:$0xff]
        %v446 = vld [vmem:[%s4 + $0x190] sm:$0xff]
        %v447 = vld [vmem:[%s4 + $0x198] sm:$0xff]
        %v448 = vld [vmem:[%s4 + $0x1a0] sm:$0xff]
        %v449 = vld [vmem:[%s4 + $0x1a8] sm:$0xff]
        %v450 = vld [vmem:[%s4 + $0x1b0] sm:$0xff]
        %v451 = vld [vmem:[%s4 + $0x1b8] sm:$0xff]
        %v452 = vld [vmem:[%s4 + $0x1c0] sm:$0xff]
        %v453 = vld [vmem:[%s4 + $0x1c8] sm:$0xff]
        %v454 = vld [vmem:[%s4 + $0x1d0] sm:$0xff]
        %v455 = vld [vmem:[%s4 + $0x1d8] sm:$0xff]
        %v456 = vld [vmem:[%s4 + $0x1e0] sm:$0xff]
        %v457 = vld [vmem:[%s4 + $0x1e8] sm:$0xff]
        %v458 = vld [vmem:[%s4 + $0x1f0] sm:$0xff]
        %v459 = vld [vmem:[%s4 + $0x1f8] sm:$0xff]
        %v460 = vld [vmem:[%s5] sm:$0x1]
        %v461 = vld [vmem:[%s6] sm:$0xff]
        %v462 = vld [vmem:[%s7] sm:$0xff]
        %v463 = vld [vmem:[#allocation2] sm:$0xff]
        %v464 = vld [vmem:[#allocation2 + $0x8] sm:$0xff]
        %v465 = vld [vmem:[#allocation2 + $0x10] sm:$0xff]
        %v466 = vld [vmem:[#allocation2 + $0x18] sm:$0xff]
        %v467 = vld [vmem:[#allocation2 + $0x20] sm:$0xff]
        %v468 = vld [vmem:[#allocation2 + $0x28] sm:$0xff]
        %v469 = vld [vmem:[#allocation2 + $0x30] sm:$0xff]
        %v470 = vld [vmem:[#allocation2 + $0x38] sm:$0xff]
        %v471 = vld [vmem:[#allocation2 + $0x40] sm:$0xff]
        %v472 = vld [vmem:[#allocation2 + $0x48] sm:$0xff]
        %v473 = vld [vmem:[#allocation2 + $0x50] sm:$0xff]
        %v474 = vld [vmem:[#allocation2 + $0x58] sm:$0xff]
        %v475 = vld [vmem:[#allocation2 + $0x60] sm:$0xff]
        %v476 = vld [vmem:[#allocation2 + $0x68] sm:$0xff]
        %v477 = vld [vmem:[#allocation2 + $0x70] sm:$0xff]
        %v478 = vld [vmem:[#allocation2 + $0x78] sm:$0xff]
        %v480 = vperm.slane %v460, 0
        %482 = vmatpush.msra.mxu0 %v411
        %483 = vmatpush.msra.mxu0 %v410
        %484 = vmatpush.msra.mxu0 %v409
        %485 = vmatpush.msra.mxu0 %v408
        %486 = vmatpush.msra.mxu0 %v407
        %487 = vmatpush.msra.mxu0 %v406
        %488 = vmatpush.msra.mxu0 %v405
        %489 = vmatpush.msra.mxu0 %v404
        %490 = vmatpush.msra.mxu0 %v403
        %491 = vmatpush.msra.mxu0 %v402
        %492 = vmatpush.msra.mxu0 %v401
        %493 = vmatpush.msra.mxu0 %v400
        %494 = vmatpush.msra.mxu0 %v399
        %495 = vmatpush.msra.mxu0 %v398
        %496 = vmatpush.msra.mxu0 %v397
        %497 = vmatpush.msra.mxu0 %v396
        %498 = vmatmul.f32.gmra.mxu0 %v463
        %v499 = vpop.f32.mrf.mxu0
        %v500 = vadd.f32 %v480, %v499
        %501 = vmatmul.f32.gmra.mxu0 %v467
        %v502 = vpop.f32.mrf.mxu0
        %v503 = vadd.f32 %v480, %v502
        %504 = vmatmul.f32.gmra.mxu0 %v471
        %v505 = vpop.f32.mrf.mxu0
        %v506 = vadd.f32 %v480, %v505
        %507 = vmatmul.f32.gmra.mxu0 %v475
        %v508 = vpop.f32.mrf.mxu0
        %v509 = vadd.f32 %v480, %v508
        %510 = vdwg.mxu0
        %511 = vmatpush.msra.mxu0 %v427
        %512 = vmatpush.msra.mxu0 %v426
        %513 = vmatpush.msra.mxu0 %v425
        %514 = vmatpush.msra.mxu0 %v424
        %515 = vmatpush.msra.mxu0 %v423
        %516 = vmatpush.msra.mxu0 %v422
        %517 = vmatpush.msra.mxu0 %v421
        %518 = vmatpush.msra.mxu0 %v420
        %519 = vmatpush.msra.mxu0 %v419
        %520 = vmatpush.msra.mxu0 %v418
        %521 = vmatpush.msra.mxu0 %v417
        %522 = vmatpush.msra.mxu0 %v416
        %523 = vmatpush.msra.mxu0 %v415
        %524 = vmatpush.msra.mxu0 %v414
        %525 = vmatpush.msra.mxu0 %v413
        %526 = vmatpush.msra.mxu0 %v412
        %527 = vmatmul.f32.gmra.mxu0 %v464
        %v528 = vpop.f32.mrf.mxu0
        %v529 = vadd.f32 %v500, %v528
        %530 = vmatmul.f32.gmra.mxu0 %v468
        %v531 = vpop.f32.mrf.mxu0
        %v532 = vadd.f32 %v503, %v531
        %533 = vmatmul.f32.gmra.mxu0 %v472
        %v534 = vpop.f32.mrf.mxu0
        %v535 = vadd.f32 %v506, %v534
        %536 = vmatmul.f32.gmra.mxu0 %v476
        %v537 = vpop.f32.mrf.mxu0
        %v538 = vadd.f32 %v509, %v537
        %539 = vdwg.mxu0
        %540 = vmatpush.msra.mxu0 %v443
        %541 = vmatpush.msra.mxu0 %v442
        %542 = vmatpush.msra.mxu0 %v441
        %543 = vmatpush.msra.mxu0 %v440
        %544 = vmatpush.msra.mxu0 %v439
        %545 = vmatpush.msra.mxu0 %v438
        %546 = vmatpush.msra.mxu0 %v437
        %547 = vmatpush.msra.mxu0 %v436
        %548 = vmatpush.msra.mxu0 %v435
        %549 = vmatpush.msra.mxu0 %v434
        %550 = vmatpush.msra.mxu0 %v433
        %551 = vmatpush.msra.mxu0 %v432
        %552 = vmatpush.msra.mxu0 %v431
        %553 = vmatpush.msra.mxu0 %v430
        %554 = vmatpush.msra.mxu0 %v429
        %555 = vmatpush.msra.mxu0 %v428
        %556 = vmatmul.f32.gmra.mxu0 %v465
        %v557 = vpop.f32.mrf.mxu0
        %v558 = vadd.f32 %v529, %v557
        %559 = vmatmul.f32.gmra.mxu0 %v469
        %v560 = vpop.f32.mrf.mxu0
        %v561 = vadd.f32 %v532, %v560
        %562 = vmatmul.f32.gmra.mxu0 %v473
        %v563 = vpop.f32.mrf.mxu0
        %v564 = vadd.f32 %v535, %v563
        %565 = vmatmul.f32.gmra.mxu0 %v477
        %v566 = vpop.f32.mrf.mxu0
        %v567 = vadd.f32 %v538, %v566
        %568 = vdwg.mxu0
        %569 = vmatpush.msra.mxu0 %v459
        %570 = vmatpush.msra.mxu0 %v458
        %571 = vmatpush.msra.mxu0 %v457
        %572 = vmatpush.msra.mxu0 %v456
        %573 = vmatpush.msra.mxu0 %v455
        %574 = vmatpush.msra.mxu0 %v454
        %575 = vmatpush.msra.mxu0 %v453
        %576 = vmatpush.msra.mxu0 %v452
        %577 = vmatpush.msra.mxu0 %v451
        %578 = vmatpush.msra.mxu0 %v450
        %579 = vmatpush.msra.mxu0 %v449
        %580 = vmatpush.msra.mxu0 %v448
        %581 = vmatpush.msra.mxu0 %v447
        %582 = vmatpush.msra.mxu0 %v446
        %583 = vmatpush.msra.mxu0 %v445
        %584 = vmatpush.msra.mxu0 %v444
        %585 = vmatmul.f32.gmra.mxu0 %v466
        %v586 = vpop.f32.mrf.mxu0
        %v587 = vadd.f32 %v558, %v586
        %588 = vmatmul.f32.gmra.mxu0 %v470
        %v589 = vpop.f32.mrf.mxu0
        %v590 = vadd.f32 %v561, %v589
        %591 = vmatmul.f32.gmra.mxu0 %v474
        %v592 = vpop.f32.mrf.mxu0
        %v593 = vadd.f32 %v564, %v592
        %594 = vmatmul.f32.gmra.mxu0 %v478
        %v595 = vpop.f32.mrf.mxu0
        %v596 = vadd.f32 %v567, %v595
        %597 = vdwg.mxu0
        %vm598 = vcmask 130048
        %599 = vst.msk [vmem:[#allocation3] sm:$0xff] %vm598, %v587
        %600 = vst.msk [vmem:[#allocation3 + $0x8] sm:$0xff] %vm598, %v590
        %601 = vst.msk [vmem:[#allocation3 + $0x10] sm:$0xff] %vm598, %v593
        %602 = vst.msk [vmem:[#allocation3 + $0x18] sm:$0xff] %vm598, %v596
        %v603 = vld [vmem:[#allocation2] sm:$0xff]
        %v604 = vld [vmem:[#allocation2 + $0x8] sm:$0xff]
        %v605 = vld [vmem:[#allocation2 + $0x10] sm:$0xff]
        %v606 = vld [vmem:[#allocation2 + $0x18] sm:$0xff]
        %v607 = vld [vmem:[#allocation2 + $0x20] sm:$0xff]
        %v608 = vld [vmem:[#allocation2 + $0x28] sm:$0xff]
        %v609 = vld [vmem:[#allocation2 + $0x30] sm:$0xff]
        %v610 = vld [vmem:[#allocation2 + $0x38] sm:$0xff]
        %v611 = vld [vmem:[#allocation2 + $0x40] sm:$0xff]
        %v612 = vld [vmem:[#allocation2 + $0x48] sm:$0xff]
        %v613 = vld [vmem:[#allocation2 + $0x50] sm:$0xff]
        %v614 = vld [vmem:[#allocation2 + $0x58] sm:$0xff]
        %v615 = vld [vmem:[#allocation2 + $0x60] sm:$0xff]
        %v616 = vld [vmem:[#allocation2 + $0x68] sm:$0xff]
        %v617 = vld [vmem:[#allocation2 + $0x70] sm:$0xff]
        %v618 = vld [vmem:[#allocation2 + $0x78] sm:$0xff]
        %v619 = vld [vmem:[#allocation3] sm:$0xff]
        %v620 = vld [vmem:[#allocation3 + $0x8] sm:$0xff]
        %v621 = vld [vmem:[#allocation3 + $0x10] sm:$0xff]
        %v622 = vld [vmem:[#allocation3 + $0x18] sm:$0xff]
        %624 = vrot.lane.b32.xlu0 %v619, 8
        %v625 = vpop.permute.xlu0 %624
        %v627 = vmul.f32 %v619, %v625
        %629 = vrot.lane.b32.xlu0 %v627, 120
        %v630 = vpop.permute.xlu0 %629
        %vm632 = vcmask 64512
        %v633 = vsel %vm632, %v630, 0.0
        %634 = vadd.xlane.f32.xlu0 %v633
        %v635 = vpop.xlane.xlu0 %634
        %637 = vrot.lane.b32.xlu0 %v620, 8
        %v638 = vpop.permute.xlu0 %637
        %v640 = vmul.f32 %v619, %v638
        %642 = vrot.lane.b32.xlu0 %v640, 120
        %v643 = vpop.permute.xlu0 %642
        %v645 = vsel %vm632, %v643, 0.0
        %646 = vadd.xlane.f32.xlu0 %v645
        %v647 = vpop.xlane.xlu0 %646
        %649 = vrot.lane.b32.xlu0 %v621, 8
        %v650 = vpop.permute.xlu0 %649
        %v652 = vmul.f32 %v619, %v650
        %654 = vrot.lane.b32.xlu0 %v652, 120
        %v655 = vpop.permute.xlu0 %654
        %v657 = vsel %vm632, %v655, 0.0
        %658 = vadd.xlane.f32.xlu0 %v657
        %v659 = vpop.xlane.xlu0 %658
        %661 = vrot.lane.b32.xlu0 %v622, 8
        %v662 = vpop.permute.xlu0 %661
        %v664 = vmul.f32 %v619, %v662
        %666 = vrot.lane.b32.xlu0 %v664, 120
        %v667 = vpop.permute.xlu0 %666
        %v669 = vsel %vm632, %v667, 0.0
        %670 = vadd.xlane.f32.xlu0 %v669
        %v671 = vpop.xlane.xlu0 %670
        %vm672 = vcmask 7168
        %v673 = vsel %vm672, %v635, %v647
        %vm674 = vcmask 15360
        %v675 = vsel %vm674, %v673, %v659
        %vm676 = vcmask 23552
        %v677 = vsel %vm676, %v675, %v671
        %vm678 = vcmask 31744
        %v679 = vsel %vm678, %v677, -inf
        %680 = vmax.xlane.f32.xlu0 %v679
        %v681 = vpop.xlane.xlu0 %680
        %v682 = vsub.f32 %v677, %v681
        %v683 = vmul.f32 %v682, 1.442695
        %v684 = vpow.pop %v683
        %v685 = vsel %vm678, %v684, 0.0
        %686 = vadd.xlane.f32.xlu0 %v685
        %v687 = vpop.xlane.xlu0 %686
        %v688 = vrcp.pop %v687
        %v689 = vmul.f32 %v687, %v688
        %v690 = vsub.f32 1.0, %v689
        %v691 = vmul.f32 %v688, %v690
        %v692 = vadd.f32 %v688, %v691
        %vm693 = vweird.f32 %v687
        %vm694 = vweird.f32 %v688
        %vm695 = vmor %vm693, %vm694
        %v696 = vsel %vm695, %v688, %v692
        %v697 = vand.u32 2147483647, %v687
        %vm698 = vcmp.eq.f32.partialorder %v697, 8.507059e+37
        %v699 = vand.u32 %v687, 2147483648
        %v700 = vor.u32 1.1754944e-38, %v699
        %v701 = vsel %vm698, %v700, %v696
        %v702 = vmul.f32 %v684, %v701
        %704 = vset.pattern.permute.xlu0 0
        %705 = vperm.xlu0 %704, %v702
        %v706 = vpop.permute.xlu0 %705
        %v708 = vmul.f32 %v706, %v461
        %709 = vset.pattern.permute.xlu0 1
        %710 = vperm.xlu0 %709, %v702
        %v711 = vpop.permute.xlu0 %710
        %v713 = vmul.f32 %v711, %v461
        %714 = vset.pattern.permute.xlu0 2
        %715 = vperm.xlu0 %714, %v702
        %v716 = vpop.permute.xlu0 %715
        %v718 = vmul.f32 %v716, %v461
        %719 = vset.pattern.permute.xlu0 3
        %720 = vperm.xlu0 %719, %v702
        %v721 = vpop.permute.xlu0 %720
        %v723 = vmul.f32 %v721, %v461
        %v724 = vsel %vm632, %v708, %v713
        %v725 = vsel %vm598, %v724, %v718
        %vm726 = vcmask 195584
        %v727 = vsel %vm726, %v725, %v723
        %v728 = vmul.f32 %v702, %v462
        %v729 = vsel %vm678, %v728, 0.0
        %730 = vadd.xlane.f32.xlu0 %v729
        %v731 = vpop.xlane.xlu0 %730
        %vm732 = vcmask 261120
        %v734 = vsel %vm732, %v727, 0
        %736 = vmatpush.msra.mxu0 0.0
        %737 = vmatpush.msra.mxu0 0.0
        %738 = vmatpush.msra.mxu0 0.0
        %739 = vmatpush.msra.mxu0 0.0
        %740 = vmatpush.msra.mxu0 0.0
        %741 = vmatpush.msra.mxu0 0.0
        %742 = vmatpush.msra.mxu0 0.0
        %743 = vmatpush.msra.mxu0 0.0
        %744 = vmatpush.msra.mxu0 0.0
        %745 = vmatpush.msra.mxu0 0.0
        %746 = vmatpush.msra.mxu0 0.0
        %747 = vmatpush.msra.mxu0 0.0
        %748 = vmatpush.msra.mxu0 %v615
        %749 = vmatpush.msra.mxu0 %v611
        %750 = vmatpush.msra.mxu0 %v607
        %751 = vmatpush.msra.mxu0 %v603
        %752 = vmatmul.f32.gmra.mxu0 %v734
        %v753 = vpop.f32.mrf.mxu0
        %v754 = vadd.f32 %v731, %v753
        %755 = vdwg.mxu0
        %756 = vmatpush.msra.mxu0 0.0
        %757 = vmatpush.msra.mxu0 0.0
        %758 = vmatpush.msra.mxu0 0.0
        %759 = vmatpush.msra.mxu0 0.0
        %760 = vmatpush.msra.mxu0 0.0
        %761 = vmatpush.msra.mxu0 0.0
        %762 = vmatpush.msra.mxu0 0.0
        %763 = vmatpush.msra.mxu0 0.0
        %764 = vmatpush.msra.mxu0 0.0
        %765 = vmatpush.msra.mxu0 0.0
        %766 = vmatpush.msra.mxu0 0.0
        %767 = vmatpush.msra.mxu0 0.0
        %768 = vmatpush.msra.mxu0 %v616
        %769 = vmatpush.msra.mxu0 %v612
        %770 = vmatpush.msra.mxu0 %v608
        %771 = vmatpush.msra.mxu0 %v604
        %772 = vmatmul.f32.gmra.mxu0 %v734
        %v773 = vpop.f32.mrf.mxu0
        %v774 = vadd.f32 %v731, %v773
        %775 = vdwg.mxu0
        %776 = vmatpush.msra.mxu0 0.0
        %777 = vmatpush.msra.mxu0 0.0
        %778 = vmatpush.msra.mxu0 0.0
        %779 = vmatpush.msra.mxu0 0.0
        %780 = vmatpush.msra.mxu0 0.0
        %781 = vmatpush.msra.mxu0 0.0
        %782 = vmatpush.msra.mxu0 0.0
        %783 = vmatpush.msra.mxu0 0.0
        %784 = vmatpush.msra.mxu0 0.0
        %785 = vmatpush.msra.mxu0 0.0
        %786 = vmatpush.msra.mxu0 0.0
        %787 = vmatpush.msra.mxu0 0.0
        %788 = vmatpush.msra.mxu0 %v617
        %789 = vmatpush.msra.mxu0 %v613
        %790 = vmatpush.msra.mxu0 %v609
        %791 = vmatpush.msra.mxu0 %v605
        %792 = vmatmul.f32.gmra.mxu0 %v734
        %v793 = vpop.f32.mrf.mxu0
        %v794 = vadd.f32 %v731, %v793
        %795 = vdwg.mxu0
        %796 = vmatpush.msra.mxu0 0.0
        %797 = vmatpush.msra.mxu0 0.0
        %798 = vmatpush.msra.mxu0 0.0
        %799 = vmatpush.msra.mxu0 0.0
        %800 = vmatpush.msra.mxu0 0.0
        %801 = vmatpush.msra.mxu0 0.0
        %802 = vmatpush.msra.mxu0 0.0
        %803 = vmatpush.msra.mxu0 0.0
        %804 = vmatpush.msra.mxu0 0.0
        %805 = vmatpush.msra.mxu0 0.0
        %806 = vmatpush.msra.mxu0 0.0
        %807 = vmatpush.msra.mxu0 0.0
        %808 = vmatpush.msra.mxu0 %v618
        %809 = vmatpush.msra.mxu0 %v614
        %810 = vmatpush.msra.mxu0 %v610
        %811 = vmatpush.msra.mxu0 %v606
        %812 = vmatmul.f32.gmra.mxu0 %v734
        %v813 = vpop.f32.mrf.mxu0
        %v814 = vadd.f32 %v731, %v813
        %815 = vdwg.mxu0
        %816 = vst [vmem:[%s343] sm:$0xff] %v754
        %817 = vst [vmem:[%s343 + $0x8] sm:$0xff] %v774
        %818 = vst [vmem:[%s343 + $0x10] sm:$0xff] %v794
        %819 = vst [vmem:[%s343 + $0x18] sm:$0xff] %v814
        %s820 = sand.u32 %s218, 1
        %s821 = scalar_lea.sflag [#allocation5], %s820
        %s822 = sand.u32 %s218, 1
        %s823 = smul.addr %s822, 32
        %s824 = scalar_lea.vmem [#allocation4], %s823
        // Predicated region
        $region53: #{tpu_custom_call.1} parent=51 // pred_check
          %p825 = pneg %p228
        $region54: #{tpu_custom_call.1} parent=51 // pred_check_branch
          %827 = sbr.rel (%p825) target = $region56
        $region55: #{tpu_custom_call.1} parent=51 // pred_region
          %829 = vsyncadd %s821, 0
          %s830 = smul.addr %s22, 4
          %s831 = smul.addr %s830, 8
          %s832 = scalar_lea.hbm %s8, %s831
          %s834 = sshll.u32 %s824, 4
          %s835 = int_to_ptr.vmem [resolvable:$true] %s834
          %s836 = sshll.u32 %s832, 4
          %s837 = int_to_ptr.hbm [resolvable:$true] %s836
          %839 = dma.vmem_to_hbm [thread:$0]  %s835, 512, %s837, %s821
        $region56: #{tpu_custom_call.1} parent=51 // pred_fallthru
          _
      $region52: #{tpu_custom_call.1} parent=5 // pred_fallthru
        _
      %p840 = scmp.le.s32.totalorder 2, %s17
      // Predicated region
      $region57: #{tpu_custom_call.1} parent=5 // pred_check
        %p841 = pneg %p840
      $region58: #{tpu_custom_call.1} parent=5 // pred_check_branch
        %843 = sbr.rel (%p841) target = $region60
      $region59: #{tpu_custom_call.1} parent=5 // pred_region
        %s844 = ssub.s32 %s17, 2
        // Predicated region
        $region61: #{tpu_custom_call.1} parent=59 // pred_check
          %p845 = pneg %p234
        $region62: #{tpu_custom_call.1} parent=59 // pred_check_branch
          %847 = sbr.rel (%p845) target = $region64
        $region63: #{tpu_custom_call.1} parent=59 // pred_region
          %s848 = sand.u32 %s219, 1
          %s849 = scalar_lea.sflag [#allocation5], %s848
          %s850 = sand.u32 %s219, 1
          %s851 = smul.addr %s850, 32
          %s852 = scalar_lea.vmem [#allocation4], %s851
          %854 = dma.done %s849, 512
        $region64: #{tpu_custom_call.1} parent=59 // pred_fallthru
          _
      $region60: #{tpu_custom_call.1} parent=5 // pred_fallthru
        _
    $region6: #{tpu_custom_call.1} parent=1 // loop_footer
      %s21 = sadd.s32 1, %s17
    $region7: #{tpu_custom_call.1} parent=1 // loop_footer_branch
      %16 = sbr.rel target = $region3
    $region8: #{tpu_custom_call.1} parent=1 // loop_exit
      _
    %855 = vsyncpa [#allocation5], 1
    %s856 = scalar_lea.sflag [#allocation5], 1
    %857 = vsyncpa %s856, 1

</llo_original>
